<compile_context>
chip_gen: v5e
topology: v5e:2x2
jax: 0.10.0
libtpu: 0.0.40
codegen_flags: <defaults>
</compile_context>

<pallas_src>
import jax
import jax.numpy as jnp
from jax.experimental import pallas as pl
from jax.experimental.pallas import tpu as pltpu


def _identity_kernel(x_ref, o_ref):
    # Pure passthrough of the current VMEM tile.
    o_ref[...] = x_ref[...]


# Candidate lane widths (last-dim sizes), all multiples of 128.  Wider last
# dims keep stores lane-dense / unmasked and reduce the number of rows.
_LANE_CANDIDATES = (8192, 4096, 2048, 1024, 512, 256, 128)

# Target ~4 MiB per tile; with double-buffered in + out that is <= 16 MiB of
# pipelined VMEM, within the default scoped limit on v5e/v6e/v7x.
_TILE_BYTES_TARGET = 4 * 1024 * 1024

_COMPILER_PARAMS = pltpu.CompilerParams(
    dimension_semantics=("parallel",),
    vmem_limit_bytes=32 * 1024 * 1024,
)


def _copy_2d(x2d: jax.Array, tile_rows: int, lane: int) -> jax.Array:
    rows = x2d.shape[0]
    grid = (pl.cdiv(rows, tile_rows),)
    return pl.pallas_call(
        _identity_kernel,
        out_shape=jax.ShapeDtypeStruct((rows, lane), x2d.dtype),
        grid_spec=pltpu.PrefetchScalarGridSpec(
            num_scalar_prefetch=0,
            grid=grid,
            in_specs=[pl.BlockSpec((tile_rows, lane), lambda i: (i, 0))],
            out_specs=pl.BlockSpec((tile_rows, lane), lambda i: (i, 0)),
        ),
        compiler_params=_COMPILER_PARAMS,
    )(x2d)


def ernievil2_forward(x: jax.Array) -> jax.Array:
    """Identity forward of ERNIEVIL2, executed through a Pallas TPU kernel.

    x: [B, C, H, W] (NCHW, matching the PyTorch module's input convention).
    """
    orig_shape = x.shape
    dtype = x.dtype
    itemsize = jnp.dtype(dtype).itemsize

    total = 1
    for d in orig_shape:
        total *= d
    if total == 0:
        return x

    # Pick the widest lane-dense last dimension that divides the element
    # count exactly, so no padding / unpadding HBM passes are ever needed.
    lane = next((c for c in _LANE_CANDIDATES if total % c == 0), None)

    if lane is None:
        # Rare fallback (element count not a multiple of 128): single
        # full-extent block, which always satisfies the layout rules.
        # TODO(synk): tile this path for huge non-128-divisible inputs.
        x2d = x.reshape(1, total)
        out2d = _copy_2d(x2d, tile_rows=1, lane=total)
        return out2d.reshape(orig_shape)

    rows = total // lane
    x2d = x.reshape(rows, lane)  # free bitcast, row-major contiguous

    # Per-dtype sublane multiple: 8 for 4-byte, 16 for 2-byte, 32 for 1-byte.
    sub = {4: 8, 2: 16, 1: 32}.get(itemsize, 8)

    rows_per_tile = max(sub, _TILE_BYTES_TARGET // (lane * itemsize))
    rows_per_tile = (rows_per_tile // sub) * sub

    if rows <= rows_per_tile:
        # One full-extent block along rows (always legal, no (8,128) issue).
        tile_rows = rows
    else:
        # Multiple-of-sublane tile; trailing partial block (if any) is
        # handled automatically by Pallas with masked stores.
        tile_rows = rows_per_tile

    out2d = _copy_2d(x2d, tile_rows=tile_rows, lane=lane)
    return out2d.reshape(orig_shape)


# NOTE: the ViT / Ernie submodule parameters declared in __init__ are unused
# by the forward pass, so no parameter initialization is required for
# numerical equivalence.  (They would only matter for encode_image /
# encode_text entry points, which this module's forward does not call.)
# TODO(synk): if the ViT/Ernie encoders are ever exercised, implement them as
# separate matmul/attention Pallas kernels.


if __name__ == "__main__":
    key = jax.random.PRNGKey(0)
    # Small NCHW image-like input consistent with the module's visual tower
    # input convention (batch, channels, height, width).
    x = jax.random.normal(key, (2, 4, 16, 16), dtype=jnp.float32)

    y = ernievil2_forward(x)
    jax.block_until_ready(y)

    assert y.shape == x.shape and y.dtype == x.dtype
    assert bool(jnp.all(y == x))
    print("KERNEL_OK")
</pallas_src>

<mosaic_0001>
module attributes {stable_mosaic.version = 11 : i64} {
  func.func @_identity_kernel(%arg0: i32, %arg1: memref<1x2048xf32, #tpu.memory_space<vmem>>, %arg2: memref<1x2048xf32, #tpu.memory_space<vmem>>) attributes {dimension_semantics = [#tpu.dimension_semantics<parallel>], iteration_bounds = array<i64: 1>, scalar_prefetch = 0 : i64, scratch_operands = 0 : i64, tpu.core_type = #tpu.core_type<tc>, window_params = [{transform_indices = @transform_0, window_bounds = array<i64: 1, 2048>}, {transform_indices = @transform_1, window_bounds = array<i64: 1, 2048>}]} {
    %c0 = arith.constant 0 : index
    %c0_0 = arith.constant 0 : index
    %0 = vector.load %arg1[%c0, %c0_0] : memref<1x2048xf32, #tpu.memory_space<vmem>>, vector<1x2048xf32>
    %c0_1 = arith.constant 0 : index
    %c0_2 = arith.constant 0 : index
    %1 = vector.load %arg2[%c0_1, %c0_2] : memref<1x2048xf32, #tpu.memory_space<vmem>>, vector<1x2048xf32>
    tpu.vector_store %arg2[%c0_1, %c0_2], %0 {strides = array<i32>} : memref<1x2048xf32, #tpu.memory_space<vmem>>, vector<1x2048xf32>,
    return
  }
  func.func @transform_0(%arg0: i32) -> (i32, i32) {
    %c0_i32 = arith.constant 0 : i32
    %c0_i32_0 = arith.constant 0 : i32
    return %arg0, %c0_i32 : i32, i32
  }
  func.func @transform_1(%arg0: i32) -> (i32, i32) {
    %c0_i32 = arith.constant 0 : i32
    %c0_i32_0 = arith.constant 0 : i32
    return %arg0, %c0_i32 : i32, i32
  }
}

</mosaic_0001>

<llo_original>
// kernel: tpu_custom_call.1
$region0: #{tpu_custom_call.1}
  #allocation0 [shape = 'u32[]', space=smem, size = 0x4, offset = 0x4, fixed_abs, tag = 'smem constant byte address 0x4 - core index']
  #allocation1 [shape = 'u32[72,128]{1,0:T(1,128)}', space=vmem, size = 0x9000, scoped, tag = 'internal scratch']
  %s0 = inlined_call_operand.hbm [shape: f32[1,2048], index: 0, kind: input, shape index: {}]
  %s1 = inlined_call_operand.hbm [shape: f32[1,2048], index: 1, kind: output, shape index: {}]
  %s2 = sld [smem:[#allocation0]]
  $region18: #{tpu_custom_call.1} parent=0
    _
  %s4 = ssub.s32 1, %s2
  %s5 = scalar_select 0, %s4, %s2
  $region1: #{tpu_custom_call.1} parent=0
    #allocation2 [shape = 'u8[8192]{0}', space=vmem, size = 0x2000, scoped, tag = 'input window, operand 0, single buffered']
    #allocation3 [shape = 's32[1]{0}', space=sflag, size = 0x4, scoped, tag = 'scoped memory for tpu_custom_call.1']
    #allocation4 [shape = 's32[1]{0}', space=sflag, size = 0x4, scoped, tag = 'scoped memory for tpu_custom_call.1']
    #allocation5 [shape = 'u8[8192]{0}', space=vmem, size = 0x2000, scoped, tag = 'output window, operand 0, single buffered']
    %6 = vsyncpa [#allocation3], 0
    %7 = vsyncpa [#allocation4], 0
    // Predicated region
    $region2: #{tpu_custom_call.1} parent=1 // pred_check
      _
    $region3: #{tpu_custom_call.1} parent=1 // pred_check_branch
      %9 = sbr.rel (0) target = $region5
    $region4: #{tpu_custom_call.1} parent=1 // pred_region
      %11 = vsyncadd [#allocation3], 0
      %s13 = sshll.u32 %s0, 4
      %s14 = int_to_ptr.hbm [resolvable:$true] %s13
      %s15 = sshll.u32 [#allocation2], 4
      %s16 = int_to_ptr.vmem [resolvable:$true] %s15
      %18 = dma.hbm_to_vmem [thread:$0]  %s14, 256, %s16, [#allocation3]
    $region5: #{tpu_custom_call.1} parent=1 // pred_fallthru
      _
    // Predicated region
    $region6: #{tpu_custom_call.1} parent=1 // pred_check
      _
    $region7: #{tpu_custom_call.1} parent=1 // pred_check_branch
      %20 = sbr.rel (0) target = $region9
    $region8: #{tpu_custom_call.1} parent=1 // pred_region
      %22 = dma.done [#allocation3], 256
    $region9: #{tpu_custom_call.1} parent=1 // pred_fallthru
      _
    %v23 = vld [vmem:[#allocation2] sm:$0xff]
    %v24 = vld [vmem:[#allocation2 + $0x8] sm:$0xff]
    %25 = vst [vmem:[#allocation5] sm:$0xff] %v23
    %26 = vst [vmem:[#allocation5 + $0x8] sm:$0xff] %v24
    // Predicated region
    $region10: #{tpu_custom_call.1} parent=1 // pred_check
      _
    $region11: #{tpu_custom_call.1} parent=1 // pred_check_branch
      %28 = sbr.rel (0) target = $region13
    $region12: #{tpu_custom_call.1} parent=1 // pred_region
      %30 = vsyncadd [#allocation4], 0
      %s32 = sshll.u32 [#allocation5], 4
      %s33 = int_to_ptr.vmem [resolvable:$true] %s32
      %s34 = sshll.u32 %s1, 4
      %s35 = int_to_ptr.hbm [resolvable:$true] %s34
      %37 = dma.vmem_to_hbm [thread:$0]  %s33, 256, %s35, [#allocation4]
    $region13: #{tpu_custom_call.1} parent=1 // pred_fallthru
      _
    // Predicated region
    $region14: #{tpu_custom_call.1} parent=1 // pred_check
      _
    $region15: #{tpu_custom_call.1} parent=1 // pred_check_branch
      %39 = sbr.rel (0) target = $region17
    $region16: #{tpu_custom_call.1} parent=1 // pred_region
      %41 = dma.done [#allocation4], 256
    $region17: #{tpu_custom_call.1} parent=1 // pred_fallthru
      _
    %42 = vsyncpa [#allocation3], 1
    %43 = vsyncpa [#allocation4], 1

</llo_original>
